<compile_context>
chip_gen: v7x
topology: tpu7x:2x2x1
jax: 0.10.0
libtpu: 0.0.40
codegen_flags: <defaults>
</compile_context>

<pallas_src>
import functools

import jax
import jax.numpy as jnp
from jax.experimental import pallas as pl
from jax.experimental.pallas import tpu as pltpu


# Largest padded node count for the fully-fused (A_hat-resident-in-VMEM) path:
# A_hat bf16 is n_p^2 * 2 B (8 MiB at 2048), comfortably inside a 48 MiB scoped
# VMEM budget that is safe on v7x (64 MiB physical) as well as v5e/v6e (128 MiB).
_FUSE_MAX_NODES = 2048
_VMEM_LIMIT = 48 * 1024 * 1024


# ---------------------------------------------------------------------------
# Shape helpers
# ---------------------------------------------------------------------------
def _round_up(x, m):
    return ((x + m - 1) // m) * m


def _pad2(x, rows, cols):
    return jnp.pad(x, ((0, rows - x.shape[0]), (0, cols - x.shape[1])))


def _pick_tile(dim, candidates):
    for t in candidates:
        if dim % t == 0:
            return t
    return dim


def _pick_m_tile(n_p):
    # Keep >= 2 row tiles whenever n_p allows so the "parallel" M axis can shard
    # across v7x's two TensorCores; 256-aligned (n_p is a multiple of 256).
    if n_p >= 1024 and n_p % 512 == 0:
        return 512
    if n_p >= 512:
        return 256
    return n_p


def _pick_k_tile(n_p, tm, rhs_cols, budget_bytes=24 * 1024 * 1024):
    # Largest K tile (amortises per-grid-step overhead) whose A tile (3 bufs)
    # and RHS tile (2 bufs) fit a conservative VMEM budget.
    for tk in (2048, 1024, 512, 256):
        if n_p % tk != 0:
            continue
        vmem = 3 * tm * tk * 2 + 2 * tk * rhs_cols * 2
        if vmem <= budget_bytes:
            return tk
    return 256


# ---------------------------------------------------------------------------
# Dense symmetrically-normalized adjacency (matches PyG gcn_norm with all-one
# edge weights: in-degree by target incl. self loop, duplicates accumulate).
# ---------------------------------------------------------------------------
# TODO(synk): for genuinely sparse graphs, replace the dense A_hat contraction
# with a block-sparse PrefetchScalarGridSpec formulation (scalar-prefetched
# per-row-tile nonzero-block lists driving the A index_map, skipping zero
# tiles); that dwarfs any dense-path micro-tuning.
def build_normalized_adjacency(edge_index, num_nodes, dtype=jnp.float32):
    src = edge_index[0]
    dst = edge_index[1]
    a = jnp.zeros((num_nodes, num_nodes), dtype=dtype)
    # A[i, j] = number of edges j -> i  (messages flow source -> target).
    a = a.at[dst, src].add(jnp.ones_like(src, dtype=dtype))
    a = a + jnp.eye(num_nodes, dtype=dtype)        # self loops, weight 1.0
    deg = jnp.sum(a, axis=1)                       # in-degree incl. self loop
    dinv = jnp.where(deg > 0, 1.0 / jnp.sqrt(deg), 0.0)
    return dinv[:, None] * a * dinv[None, :]


# ---------------------------------------------------------------------------
# Kernel 1: fully-fused encoder for graphs whose A_hat fits in VMEM.
#   refs = (a_hat, x@w1, b1, w2, b2, ..., w_depth, b_depth, out)
# A_hat is read from HBM once and reused for every layer.
# ---------------------------------------------------------------------------
def _gae_fused_kernel(*refs, depth):
    a_ref, o_ref = refs[0], refs[-1]
    a = a_ref[...]                                           # bf16 (n_p, n_p)
    # Layer 0: aggregation of the XLA-precomputed feature transform X @ W1.
    acc = jnp.dot(a, refs[1][...], preferred_element_type=jnp.float32)
    acc = acc + refs[2][...]
    for l in range(1, depth):
        h = jnp.maximum(acc, 0.0).astype(jnp.bfloat16)       # relu on hidden
        w_ref, b_ref = refs[1 + 2 * l], refs[2 + 2 * l]
        hw = jnp.dot(h, w_ref[...],
                     preferred_element_type=jnp.float32).astype(jnp.bfloat16)
        acc = jnp.dot(a, hw, preferred_element_type=jnp.float32) + b_ref[...]
    # NOTE: padded rows pick up bias(+relu) garbage, but A_hat's padded columns
    # are zero so it never leaks into valid rows; the wrapper slices it off.
    o_ref[...] = acc.astype(o_ref.dtype)


def _gae_fused_call(a_p, xw1_p, b1_p, ws_p, bs_p):
    n_p = a_p.shape[0]
    depth = 1 + len(ws_p)
    f_out_p = (bs_p[-1] if bs_p else b1_p).shape[1]
    args = [a_p, xw1_p, b1_p]
    for w_p, b_p in zip(ws_p, bs_p):
        args += [w_p, b_p]
    return pl.pallas_call(
        functools.partial(_gae_fused_kernel, depth=depth),
        out_shape=jax.ShapeDtypeStruct((n_p, f_out_p), jnp.bfloat16),
        compiler_params=pltpu.CompilerParams(vmem_limit_bytes=_VMEM_LIMIT),
    )(*args)


# ---------------------------------------------------------------------------
# Kernels 2/3: tiled per-layer path for graphs too large for the fused path.
# ---------------------------------------------------------------------------
def _gcn_agg_kernel(a_ref, xw_ref, b_ref, o_ref, acc_ref, *, apply_relu):
    """out = act(A_hat @ XW + b): aggregation only (XW precomputed in XLA)."""
    @pl.when(pl.program_id(2) == 0)
    def _init():
        acc_ref[...] = jnp.zeros_like(acc_ref)

    acc_ref[...] += jnp.dot(a_ref[...], xw_ref[...],
                            preferred_element_type=jnp.float32)

    @pl.when(pl.program_id(2) == pl.num_programs(2) - 1)
    def _finalize():
        out = acc_ref[...] + b_ref[...]
        if apply_relu:
            out = jnp.maximum(out, 0.0)
        o_ref[...] = out.astype(o_ref.dtype)


def _gcn_fused_layer_kernel(a_ref, x_ref, w_ref, b_ref, o_ref, acc_ref, *,
                            apply_relu):
    """out = act(A_hat @ (X @ W) + b). X@W is recomputed per A row-tile (free
    MXU filler on a memory-bound kernel) so XW never round-trips HBM."""
    @pl.when(pl.program_id(2) == 0)
    def _init():
        acc_ref[...] = jnp.zeros_like(acc_ref)

    xw = jnp.dot(x_ref[...], w_ref[...], preferred_element_type=jnp.float32)
    acc_ref[...] += jnp.dot(a_ref[...], xw.astype(jnp.bfloat16),
                            preferred_element_type=jnp.float32)

    @pl.when(pl.program_id(2) == pl.num_programs(2) - 1)
    def _finalize():
        out = acc_ref[...] + b_ref[...]
        if apply_relu:
            out = jnp.maximum(out, 0.0)
        o_ref[...] = out.astype(o_ref.dtype)


def _a_hat_spec(tm, tk, k_steps):
    # Deeper pipelining on the dominant (A_hat) HBM stream once the K loop is
    # long enough to benefit; plain double-buffering otherwise.
    if k_steps >= 3:
        return pl.BlockSpec((tm, tk), lambda i, j, k: (i, k),
                            pipeline_mode=pl.Buffered(3))
    return pl.BlockSpec((tm, tk), lambda i, j, k: (i, k))


def gcn_aggregate(a_p, xw_p, b_p, *, apply_relu):
    n_p = a_p.shape[0]
    f_o_p = xw_p.shape[1]
    tm = _pick_m_tile(n_p)
    tn = _pick_tile(f_o_p, (256, 128))
    tk = _pick_k_tile(n_p, tm, rhs_cols=tn)
    grid = (n_p // tm, f_o_p // tn, n_p // tk)
    return pl.pallas_call(
        functools.partial(_gcn_agg_kernel, apply_relu=apply_relu),
        out_shape=jax.ShapeDtypeStruct((n_p, f_o_p), jnp.bfloat16),
        grid_spec=pltpu.PrefetchScalarGridSpec(
            num_scalar_prefetch=0,
            grid=grid,
            in_specs=[
                _a_hat_spec(tm, tk, grid[2]),
                pl.BlockSpec((tk, tn), lambda i, j, k: (k, j)),
                pl.BlockSpec((1, tn), lambda i, j, k: (0, j)),
            ],
            out_specs=pl.BlockSpec((tm, tn), lambda i, j, k: (i, j)),
            scratch_shapes=[pltpu.VMEM((tm, tn), jnp.float32)],
        ),
        compiler_params=pltpu.CompilerParams(
            dimension_semantics=("parallel", "parallel", "arbitrary"),
            vmem_limit_bytes=_VMEM_LIMIT,
        ),
    )(a_p, xw_p, b_p)


def gcn_layer_fused(a_p, x_p, w_p, b_p, *, apply_relu):
    n_p = a_p.shape[0]
    f_i_p, f_o_p = w_p.shape
    tm = _pick_m_tile(n_p)
    tn = _pick_tile(f_o_p, (256, 128))
    tk = _pick_k_tile(n_p, tm, rhs_cols=f_i_p)
    grid = (n_p // tm, f_o_p // tn, n_p // tk)
    return pl.pallas_call(
        functools.partial(_gcn_fused_layer_kernel, apply_relu=apply_relu),
        out_shape=jax.ShapeDtypeStruct((n_p, f_o_p), jnp.bfloat16),
        grid_spec=pltpu.PrefetchScalarGridSpec(
            num_scalar_prefetch=0,
            grid=grid,
            in_specs=[
                _a_hat_spec(tm, tk, grid[2]),
                pl.BlockSpec((tk, f_i_p), lambda i, j, k: (k, 0)),
                pl.BlockSpec((f_i_p, tn), lambda i, j, k: (0, j)),
                pl.BlockSpec((1, tn), lambda i, j, k: (0, j)),
            ],
            out_specs=pl.BlockSpec((tm, tn), lambda i, j, k: (i, j)),
            scratch_shapes=[pltpu.VMEM((tm, tn), jnp.float32)],
        ),
        compiler_params=pltpu.CompilerParams(
            dimension_semantics=("parallel", "parallel", "arbitrary"),
            vmem_limit_bytes=_VMEM_LIMIT,
        ),
    )(a_p, x_p, w_p, b_p)


# ---------------------------------------------------------------------------
# Parameters (glorot W, zero bias -- GCNConv defaults) and forward
# ---------------------------------------------------------------------------
def init_gae_encoder_params(key, in_channels, hidden_channels, out_channels,
                            depth=2):
    dims = [in_channels] + [hidden_channels] * (depth - 1) + [out_channels]
    params = []
    for i in range(depth):
        key, sub = jax.random.split(key)
        fan_in, fan_out = dims[i], dims[i + 1]
        limit = jnp.sqrt(6.0 / (fan_in + fan_out))
        w = jax.random.uniform(sub, (fan_in, fan_out), jnp.float32, -limit, limit)
        b = jnp.zeros((1, fan_out), jnp.float32)
        params.append((w, b))
    return params


def gae_encoder_apply(params, x, a_hat, *, fuse_all_layers=None):
    """Encoder forward given a prebuilt (n, n) normalized adjacency.

    Callers with a static graph should build `a_hat` once and reuse it here
    (avoids re-running the dense scatter / gcn_norm every call)."""
    n, _ = x.shape
    depth = len(params)
    out_channels = params[-1][0].shape[1]
    n_p = _round_up(n, 256)

    # bf16 A_hat, cast BEFORE padding (no n_p^2 f32 temporaries).
    a_p = _pad2(a_hat.astype(jnp.bfloat16), n_p, n_p)

    # Layer-0 feature transform in plain XLA: (n, f_in) @ (f_in, hidden) is
    # tiny and f_in need not be 128-aligned -- padding it would inflate the
    # X read and MXU work for nothing.
    w1, b1 = params[0]
    f1_p = _round_up(w1.shape[1], 128)
    xw1 = x.astype(jnp.float32) @ w1.astype(jnp.float32)
    xw1_p = _pad2(xw1, n_p, f1_p).astype(jnp.bfloat16)
    b1_p = _pad2(b1.astype(jnp.float32), 1, f1_p)

    # Remaining layers' (small) weights, padded to lane-dense 128 multiples.
    ws_p, bs_p = [], []
    for i in range(1, depth):
        w, b = params[i]
        f_i_p = _round_up(w.shape[0], 128)
        f_o_p = _round_up(w.shape[1], 128)
        ws_p.append(_pad2(w.astype(jnp.float32), f_i_p, f_o_p).astype(jnp.bfloat16))
        bs_p.append(_pad2(b.astype(jnp.float32), 1, f_o_p))

    if fuse_all_layers is None:
        fuse_all_layers = n_p <= _FUSE_MAX_NODES

    if fuse_all_layers:
        # One HBM read of A_hat total (resident in VMEM across all layers).
        out_p = _gae_fused_call(a_p, xw1_p, b1_p, ws_p, bs_p)
    else:
        # A_hat streamed once per layer; X@W fused into the aggregation kernel.
        h = gcn_aggregate(a_p, xw1_p, b1_p, apply_relu=depth > 1)
        for i in range(1, depth):
            h = gcn_layer_fused(a_p, h, ws_p[i - 1], bs_p[i - 1],
                                apply_relu=i < depth - 1)
        out_p = h

    return out_p[:n, :out_channels].astype(jnp.float32)


def gae_encoder_forward(params, x, edge_index, *, fuse_all_layers=None):
    a_hat = build_normalized_adjacency(edge_index, x.shape[0])
    return gae_encoder_apply(params, x, a_hat, fuse_all_layers=fuse_all_layers)


# Pure-JAX f32 reference (same module semantics, no padding / no bf16).
def gae_encoder_reference(params, x, edge_index):
    n = x.shape[0]
    a_hat = build_normalized_adjacency(edge_index, n, dtype=jnp.float32)
    h = x.astype(jnp.float32)
    for i, (w, b) in enumerate(params):
        h = a_hat @ (h @ w) + b
        if i < len(params) - 1:
            h = jnp.maximum(h, 0.0)
    return h


if __name__ == "__main__":
    key = jax.random.PRNGKey(0)

    # Small, module-consistent shapes: N nodes with in_channels features.
    num_nodes = 8
    in_channels = 4
    hidden_channels = 32
    out_channels = 16
    depth = 2

    k_x, k_p = jax.random.split(key)
    x = jax.random.normal(k_x, (num_nodes, in_channels), dtype=jnp.float32)

    # Deterministic directed edge list (2, E): a ring plus a few chords.
    src = jnp.array([0, 1, 2, 3, 4, 5, 6, 7, 0, 2, 4, 6], dtype=jnp.int32)
    dst = jnp.array([1, 2, 3, 4, 5, 6, 7, 0, 4, 6, 0, 2], dtype=jnp.int32)
    edge_index = jnp.stack([src, dst], axis=0)     # (2, 12)

    params = init_gae_encoder_params(k_p, in_channels, hidden_channels,
                                     out_channels, depth=depth)

    ref = gae_encoder_reference(params, x, edge_index)

    # Path 1: fully-fused encoder (A_hat VMEM-resident; default for small graphs).
    fwd_fused = jax.jit(functools.partial(gae_encoder_forward,
                                          fuse_all_layers=True))
    out_fused = jax.block_until_ready(fwd_fused(params, x, edge_index))
    assert out_fused.shape == (num_nodes, out_channels)
    # bf16 matmul operands with f32 accumulation -> loosened tolerance vs f32 ref.
    assert jnp.allclose(out_fused, ref, atol=5e-2, rtol=5e-2)

    # Path 2: tiled per-layer kernels (the path large graphs take).
    fwd_tiled = jax.jit(functools.partial(gae_encoder_forward,
                                          fuse_all_layers=False))
    out_tiled = jax.block_until_ready(fwd_tiled(params, x, edge_index))
    assert out_tiled.shape == (num_nodes, out_channels)
    assert jnp.allclose(out_tiled, ref, atol=5e-2, rtol=5e-2)

    print("KERNEL_OK")
</pallas_src>

<mosaic_0001>
module attributes {stable_mosaic.version = 11 : i64} {
  func.func @_gae_fused_kernel(%arg0: memref<256x256xbf16, #tpu.memory_space<vmem>>, %arg1: memref<256x128xbf16, #tpu.memory_space<vmem>>, %arg2: memref<1x128xf32, #tpu.memory_space<vmem>>, %arg3: memref<128x128xbf16, #tpu.memory_space<vmem>>, %arg4: memref<1x128xf32, #tpu.memory_space<vmem>>, %arg5: memref<256x128xbf16, #tpu.memory_space<vmem>>) attributes {dimension_semantics = [], scalar_prefetch = 0 : i64, scratch_operands = 0 : i64, tpu.core_type = #tpu.core_type<tc>} {
    %c0 = arith.constant 0 : index
    %c0_0 = arith.constant 0 : index
    %0 = vector.load %arg0[%c0, %c0_0] : memref<256x256xbf16, #tpu.memory_space<vmem>>, vector<256x256xbf16>
    %c0_1 = arith.constant 0 : index
    %c0_2 = arith.constant 0 : index
    %1 = vector.load %arg1[%c0_1, %c0_2] : memref<256x128xbf16, #tpu.memory_space<vmem>>, vector<256x128xbf16>
    %cst = arith.constant dense<0.000000e+00> : vector<256x128xf32>
    %2 = tpu.matmul %0, %1, %cst {dimension_numbers = #tpu.dot_dimension_numbers<[1], [0], [0], [1], [0, 0, 1, 1], [], []>} : vector<256x256xbf16>, vector<256x128xbf16>, vector<256x128xf32> -> vector<256x128xf32>
    %c0_3 = arith.constant 0 : index
    %c0_4 = arith.constant 0 : index
    %3 = vector.load %arg2[%c0_3, %c0_4] : memref<1x128xf32, #tpu.memory_space<vmem>>, vector<1x128xf32>
    %4 = vector.broadcast %3 : vector<1x128xf32> to vector<256x128xf32>
    %5 = arith.addf %2, %4 : vector<256x128xf32>
    %cst_5 = arith.constant 0.000000e+00 : f32
    %6 = vector.broadcast %cst_5 : f32 to vector<256x128xf32>
    %7 = arith.maximumf %5, %6 : vector<256x128xf32>
    %8 = arith.truncf %7 : vector<256x128xf32> to vector<256x128xbf16>
    %c0_6 = arith.constant 0 : index
    %c0_7 = arith.constant 0 : index
    %9 = vector.load %arg3[%c0_6, %c0_7] : memref<128x128xbf16, #tpu.memory_space<vmem>>, vector<128x128xbf16>
    %cst_8 = arith.constant dense<0.000000e+00> : vector<256x128xf32>
    %10 = tpu.matmul %8, %9, %cst_8 {dimension_numbers = #tpu.dot_dimension_numbers<[1], [0], [0], [1], [0, 0, 1, 1], [], []>} : vector<256x128xbf16>, vector<128x128xbf16>, vector<256x128xf32> -> vector<256x128xf32>
    %11 = arith.truncf %10 : vector<256x128xf32> to vector<256x128xbf16>
    %cst_9 = arith.constant dense<0.000000e+00> : vector<256x128xf32>
    %12 = tpu.matmul %0, %11, %cst_9 {dimension_numbers = #tpu.dot_dimension_numbers<[1], [0], [0], [1], [0, 0, 1, 1], [], []>} : vector<256x256xbf16>, vector<256x128xbf16>, vector<256x128xf32> -> vector<256x128xf32>
    %c0_10 = arith.constant 0 : index
    %c0_11 = arith.constant 0 : index
    %13 = vector.load %arg4[%c0_10, %c0_11] : memref<1x128xf32, #tpu.memory_space<vmem>>, vector<1x128xf32>
    %14 = vector.broadcast %13 : vector<1x128xf32> to vector<256x128xf32>
    %15 = arith.addf %12, %14 : vector<256x128xf32>
    %16 = arith.truncf %15 : vector<256x128xf32> to vector<256x128xbf16>
    %c0_12 = arith.constant 0 : index
    %c0_13 = arith.constant 0 : index
    %17 = vector.load %arg5[%c0_12, %c0_13] : memref<256x128xbf16, #tpu.memory_space<vmem>>, vector<256x128xbf16>
    tpu.vector_store %arg5[%c0_12, %c0_13], %16 {strides = array<i32>} : memref<256x128xbf16, #tpu.memory_space<vmem>>, vector<256x128xbf16>,
    return
  }
}

</mosaic_0001>

<llo_original>
// kernel: gae_encoder_forward.1
$region0: #{gae_encoder_forward.1}
  #allocation0 [shape = 'u32[]', space=smem, size = 0x4, offset = 0x4, fixed_abs, tag = 'smem constant byte address 0x4 - core index']
  #allocation1 [shape = 'u32[144,128]{1,0:T(1,128)}', space=vmem, size = 0x12000, scoped, tag = 'internal scratch']
  %s0 = inlined_call_operand.vmem [shape: bf16[256,256], index: 0, kind: input, shape index: {}]
  %s1 = inlined_call_operand.vmem [shape: bf16[256,128], index: 1, kind: input, shape index: {}]
  %s2 = inlined_call_operand.vmem [shape: f32[1,128], index: 2, kind: input, shape index: {}]
  %s3 = inlined_call_operand.vmem [shape: bf16[128,128], index: 3, kind: input, shape index: {}]
  %s4 = inlined_call_operand.vmem [shape: f32[1,128], index: 4, kind: input, shape index: {}]
  %s5 = inlined_call_operand.vmem [shape: bf16[256,128], index: 5, kind: output, shape index: {}]
  %s6 = sld [smem:[#allocation0]]
  $region30: #{gae_encoder_forward.1} parent=0
    _
  %s8 = ssub.s32 1, %s6
  %s9 = scalar_select 0, %s8, %s6
  // Predicated region
  $region2: #{gae_encoder_forward.1} parent=0 // pred_check
    _
  $region3: #{gae_encoder_forward.1} parent=0 // pred_check_branch
    %11 = sbr.rel (0) target = $region5
  $region4: #{gae_encoder_forward.1} parent=0 // pred_region
    _
  $region5: #{gae_encoder_forward.1} parent=0 // pred_fallthru
    _
  // Predicated region
  $region6: #{gae_encoder_forward.1} parent=0 // pred_check
    _
  $region7: #{gae_encoder_forward.1} parent=0 // pred_check_branch
    %13 = sbr.rel (0) target = $region9
  $region8: #{gae_encoder_forward.1} parent=0 // pred_region
    _
  $region9: #{gae_encoder_forward.1} parent=0 // pred_fallthru
    _
  // Predicated region
  $region10: #{gae_encoder_forward.1} parent=0 // pred_check
    _
  $region11: #{gae_encoder_forward.1} parent=0 // pred_check_branch
    %15 = sbr.rel (0) target = $region13
  $region12: #{gae_encoder_forward.1} parent=0 // pred_region
    _
  $region13: #{gae_encoder_forward.1} parent=0 // pred_fallthru
    _
  // Predicated region
  $region14: #{gae_encoder_forward.1} parent=0 // pred_check
    _
  $region15: #{gae_encoder_forward.1} parent=0 // pred_check_branch
    %17 = sbr.rel (0) target = $region17
  $region16: #{gae_encoder_forward.1} parent=0 // pred_region
    _
  $region17: #{gae_encoder_forward.1} parent=0 // pred_fallthru
    _
  // Predicated region
  $region18: #{gae_encoder_forward.1} parent=0 // pred_check
    _
  $region19: #{gae_encoder_forward.1} parent=0 // pred_check_branch
    %19 = sbr.rel (0) target = $region21
  $region20: #{gae_encoder_forward.1} parent=0 // pred_region
    _
  $region21: #{gae_encoder_forward.1} parent=0 // pred_fallthru
    _
  %v21 = vld [vmem:[%s0] sm:$0xff]
  %v22 = vld [vmem:[%s0 + $0x8] sm:$0xff]
  %v23 = vld [vmem:[%s0 + $0x10] sm:$0xff]
  %v24 = vld [vmem:[%s0 + $0x18] sm:$0xff]
  %v25 = vld [vmem:[%s0 + $0x20] sm:$0xff]
  %v26 = vld [vmem:[%s0 + $0x28] sm:$0xff]
  %v27 = vld [vmem:[%s0 + $0x30] sm:$0xff]
  %v28 = vld [vmem:[%s0 + $0x38] sm:$0xff]
  %v29 = vld [vmem:[%s0 + $0x40] sm:$0xff]
  %v30 = vld [vmem:[%s0 + $0x48] sm:$0xff]
  %v31 = vld [vmem:[%s0 + $0x50] sm:$0xff]
  %v32 = vld [vmem:[%s0 + $0x58] sm:$0xff]
  %v33 = vld [vmem:[%s0 + $0x60] sm:$0xff]
  %v34 = vld [vmem:[%s0 + $0x68] sm:$0xff]
  %v35 = vld [vmem:[%s0 + $0x70] sm:$0xff]
  %v36 = vld [vmem:[%s0 + $0x78] sm:$0xff]
  %v37 = vld [vmem:[%s0 + $0x80] sm:$0xff]
  %v38 = vld [vmem:[%s0 + $0x88] sm:$0xff]
  %v39 = vld [vmem:[%s0 + $0x90] sm:$0xff]
  %v40 = vld [vmem:[%s0 + $0x98] sm:$0xff]
  %v41 = vld [vmem:[%s0 + $0xa0] sm:$0xff]
  %v42 = vld [vmem:[%s0 + $0xa8] sm:$0xff]
  %v43 = vld [vmem:[%s0 + $0xb0] sm:$0xff]
  %v44 = vld [vmem:[%s0 + $0xb8] sm:$0xff]
  %v45 = vld [vmem:[%s0 + $0xc0] sm:$0xff]
  %v46 = vld [vmem:[%s0 + $0xc8] sm:$0xff]
  %v47 = vld [vmem:[%s0 + $0xd0] sm:$0xff]
  %v48 = vld [vmem:[%s0 + $0xd8] sm:$0xff]
  %v49 = vld [vmem:[%s0 + $0xe0] sm:$0xff]
  %v50 = vld [vmem:[%s0 + $0xe8] sm:$0xff]
  %v51 = vld [vmem:[%s0 + $0xf0] sm:$0xff]
  %v52 = vld [vmem:[%s0 + $0xf8] sm:$0xff]
  %v53 = vld [vmem:[%s1] sm:$0xf]
  %v54 = vld [vmem:[%s1 + $0x4] sm:$0xf]
  %v55 = vld [vmem:[%s1 + $0x8] sm:$0xf]
  %v56 = vld [vmem:[%s1 + $0xc] sm:$0xf]
  %v57 = vld [vmem:[%s1 + $0x10] sm:$0xf]
  %v58 = vld [vmem:[%s1 + $0x14] sm:$0xf]
  %v59 = vld [vmem:[%s1 + $0x18] sm:$0xf]
  %v60 = vld [vmem:[%s1 + $0x1c] sm:$0xf]
  %v61 = vld [vmem:[%s1 + $0x20] sm:$0xf]
  %v62 = vld [vmem:[%s1 + $0x24] sm:$0xf]
  %v63 = vld [vmem:[%s1 + $0x28] sm:$0xf]
  %v64 = vld [vmem:[%s1 + $0x2c] sm:$0xf]
  %v65 = vld [vmem:[%s1 + $0x30] sm:$0xf]
  %v66 = vld [vmem:[%s1 + $0x34] sm:$0xf]
  %v67 = vld [vmem:[%s1 + $0x38] sm:$0xf]
  %v68 = vld [vmem:[%s1 + $0x3c] sm:$0xf]
  %v69 = vld [vmem:[%s1 + $0x40] sm:$0xf]
  %v70 = vld [vmem:[%s1 + $0x44] sm:$0xf]
  %v71 = vld [vmem:[%s1 + $0x48] sm:$0xf]
  %v72 = vld [vmem:[%s1 + $0x4c] sm:$0xf]
  %v73 = vld [vmem:[%s1 + $0x50] sm:$0xf]
  %v74 = vld [vmem:[%s1 + $0x54] sm:$0xf]
  %v75 = vld [vmem:[%s1 + $0x58] sm:$0xf]
  %v76 = vld [vmem:[%s1 + $0x5c] sm:$0xf]
  %v77 = vld [vmem:[%s1 + $0x60] sm:$0xf]
  %v78 = vld [vmem:[%s1 + $0x64] sm:$0xf]
  %v79 = vld [vmem:[%s1 + $0x68] sm:$0xf]
  %v80 = vld [vmem:[%s1 + $0x6c] sm:$0xf]
  %v81 = vld [vmem:[%s1 + $0x70] sm:$0xf]
  %v82 = vld [vmem:[%s1 + $0x74] sm:$0xf]
  %v83 = vld [vmem:[%s1 + $0x78] sm:$0xf]
  %v84 = vld [vmem:[%s1 + $0x7c] sm:$0xf]
  %v85 = vld [vmem:[%s2] sm:$0x1]
  %v87 = vlaneseq
  %v88 = vshrl.u32 %v87, 7
  %v89 = vsub.s32 0, %v88
  %v90 = vrot.slane %v85, %v89
  %v124 = vunpack.c.l.b16 %v21
  %v125 = vunpack.c.h.b16 %v21
  %v126 = vunpack.c.l.b16 %v22
  %v127 = vunpack.c.h.b16 %v22
  %v128 = vunpack.c.l.b16 %v23
  %v129 = vunpack.c.h.b16 %v23
  %v130 = vunpack.c.l.b16 %v24
  %v131 = vunpack.c.h.b16 %v24
  %v132 = vunpack.c.l.b16 %v25
  %v133 = vunpack.c.h.b16 %v25
  %v134 = vunpack.c.l.b16 %v26
  %v135 = vunpack.c.h.b16 %v26
  %v136 = vunpack.c.l.b16 %v27
  %v137 = vunpack.c.h.b16 %v27
  %v138 = vunpack.c.l.b16 %v28
  %v139 = vunpack.c.h.b16 %v28
  %v140 = vunpack.c.l.b16 %v29
  %v141 = vunpack.c.h.b16 %v29
  %v142 = vunpack.c.l.b16 %v30
  %v143 = vunpack.c.h.b16 %v30
  %v144 = vunpack.c.l.b16 %v31
  %v145 = vunpack.c.h.b16 %v31
  %v146 = vunpack.c.l.b16 %v32
  %v147 = vunpack.c.h.b16 %v32
  %v148 = vunpack.c.l.b16 %v33
  %v149 = vunpack.c.h.b16 %v33
  %v150 = vunpack.c.l.b16 %v34
  %v151 = vunpack.c.h.b16 %v34
  %v152 = vunpack.c.l.b16 %v35
  %v153 = vunpack.c.h.b16 %v35
  %v154 = vunpack.c.l.b16 %v36
  %v155 = vunpack.c.h.b16 %v36
  %v156 = vunpack.c.l.b16 %v37
  %v157 = vunpack.c.h.b16 %v37
  %v158 = vunpack.c.l.b16 %v38
  %v159 = vunpack.c.h.b16 %v38
  %v160 = vunpack.c.l.b16 %v39
  %v161 = vunpack.c.h.b16 %v39
  %v162 = vunpack.c.l.b16 %v40
  %v163 = vunpack.c.h.b16 %v40
  %v164 = vunpack.c.l.b16 %v41
  %v165 = vunpack.c.h.b16 %v41
  %v166 = vunpack.c.l.b16 %v42
  %v167 = vunpack.c.h.b16 %v42
  %v168 = vunpack.c.l.b16 %v43
  %v169 = vunpack.c.h.b16 %v43
  %v170 = vunpack.c.l.b16 %v44
  %v171 = vunpack.c.h.b16 %v44
  %v172 = vunpack.c.l.b16 %v45
  %v173 = vunpack.c.h.b16 %v45
  %v174 = vunpack.c.l.b16 %v46
  %v175 = vunpack.c.h.b16 %v46
  %v176 = vunpack.c.l.b16 %v47
  %v177 = vunpack.c.h.b16 %v47
  %v178 = vunpack.c.l.b16 %v48
  %v179 = vunpack.c.h.b16 %v48
  %v180 = vunpack.c.l.b16 %v49
  %v181 = vunpack.c.h.b16 %v49
  %v182 = vunpack.c.l.b16 %v50
  %v183 = vunpack.c.h.b16 %v50
  %v184 = vunpack.c.l.b16 %v51
  %v185 = vunpack.c.h.b16 %v51
  %v186 = vunpack.c.l.b16 %v52
  %v187 = vunpack.c.h.b16 %v52
  %v188 = vpack.c.b16 %v126, %v124
  %v189 = vpack.c.b16 %v127, %v125
  %v190 = vpack.c.b16 %v130, %v128
  %v191 = vpack.c.b16 %v131, %v129
  %v192 = vpack.c.b16 %v134, %v132
  %v193 = vpack.c.b16 %v135, %v133
  %v194 = vpack.c.b16 %v138, %v136
  %v195 = vpack.c.b16 %v139, %v137
  %v196 = vpack.c.b16 %v142, %v140
  %v197 = vpack.c.b16 %v143, %v141
  %v198 = vpack.c.b16 %v146, %v144
  %v199 = vpack.c.b16 %v147, %v145
  %v200 = vpack.c.b16 %v150, %v148
  %v201 = vpack.c.b16 %v151, %v149
  %v202 = vpack.c.b16 %v154, %v152
  %v203 = vpack.c.b16 %v155, %v153
  %v204 = vpack.c.b16 %v158, %v156
  %v205 = vpack.c.b16 %v159, %v157
  %v206 = vpack.c.b16 %v162, %v160
  %v207 = vpack.c.b16 %v163, %v161
  %v208 = vpack.c.b16 %v166, %v164
  %v209 = vpack.c.b16 %v167, %v165
  %v210 = vpack.c.b16 %v170, %v168
  %v211 = vpack.c.b16 %v171, %v169
  %v212 = vpack.c.b16 %v174, %v172
  %v213 = vpack.c.b16 %v175, %v173
  %v214 = vpack.c.b16 %v178, %v176
  %v215 = vpack.c.b16 %v179, %v177
  %v216 = vpack.c.b16 %v182, %v180
  %v217 = vpack.c.b16 %v183, %v181
  %v218 = vpack.c.b16 %v186, %v184
  %v219 = vpack.c.b16 %v187, %v185
  %v284 = vunpack.c.l.b16 %v53
  %v285 = vunpack.c.l.b16 %v54
  %v286 = vunpack.c.l.b16 %v55
  %v287 = vunpack.c.l.b16 %v56
  %v288 = vunpack.c.l.b16 %v57
  %v289 = vunpack.c.l.b16 %v58
  %v290 = vunpack.c.l.b16 %v59
  %v291 = vunpack.c.l.b16 %v60
  %v292 = vunpack.c.l.b16 %v61
  %v293 = vunpack.c.l.b16 %v62
  %v294 = vunpack.c.l.b16 %v63
  %v295 = vunpack.c.l.b16 %v64
  %v296 = vunpack.c.l.b16 %v65
  %v297 = vunpack.c.l.b16 %v66
  %v298 = vunpack.c.l.b16 %v67
  %v299 = vunpack.c.l.b16 %v68
  %v300 = vunpack.c.l.b16 %v69
  %v301 = vunpack.c.l.b16 %v70
  %v302 = vunpack.c.l.b16 %v71
  %v303 = vunpack.c.l.b16 %v72
  %v304 = vunpack.c.l.b16 %v73
  %v305 = vunpack.c.l.b16 %v74
  %v306 = vunpack.c.l.b16 %v75
  %v307 = vunpack.c.l.b16 %v76
  %v308 = vunpack.c.l.b16 %v77
  %v309 = vunpack.c.l.b16 %v78
  %v310 = vunpack.c.l.b16 %v79
  %v311 = vunpack.c.l.b16 %v80
  %v312 = vunpack.c.l.b16 %v81
  %v313 = vunpack.c.l.b16 %v82
  %v314 = vunpack.c.l.b16 %v83
  %v315 = vunpack.c.l.b16 %v84
  %v316 = vpack.c.b16 %v285, %v284
  %v317 = vpack.c.b16 %v287, %v286
  %v318 = vpack.c.b16 %v289, %v288
  %v319 = vpack.c.b16 %v291, %v290
  %v320 = vpack.c.b16 %v293, %v292
  %v321 = vpack.c.b16 %v295, %v294
  %v322 = vpack.c.b16 %v297, %v296
  %v323 = vpack.c.b16 %v299, %v298
  %v324 = vpack.c.b16 %v301, %v300
  %v325 = vpack.c.b16 %v303, %v302
  %v326 = vpack.c.b16 %v305, %v304
  %v327 = vpack.c.b16 %v307, %v306
  %v328 = vpack.c.b16 %v309, %v308
  %v329 = vpack.c.b16 %v311, %v310
  %v330 = vpack.c.b16 %v313, %v312
  %v331 = vpack.c.b16 %v315, %v314
  %348 = vmatprep.subr.bf16.mxu0 0
  %349 = vmatpush1.bf16.msra.mxu0 %v316
  %350 = vmatprep.subr.bf16.mxu0 0
  %351 = vmatpush1.bf16.msra.mxu0 %v317
  %352 = vmatprep.subr.bf16.mxu0 0
  %353 = vmatpush1.bf16.msra.mxu0 %v318
  %354 = vmatprep.subr.bf16.mxu0 0
  %355 = vmatpush1.bf16.msra.mxu0 %v319
  %356 = vmatprep.subr.bf16.mxu0 0
  %357 = vmatpush1.bf16.msra.mxu0 %v320
  %358 = vmatprep.subr.bf16.mxu0 0
  %359 = vmatpush1.bf16.msra.mxu0 %v321
  %360 = vmatprep.subr.bf16.mxu0 0
  %361 = vmatpush1.bf16.msra.mxu0 %v322
  %362 = vmatprep.subr.bf16.mxu0 0
  %363 = vmatpush1.bf16.msra.mxu0 %v323
  %364 = vmatprep.subr.bf16.mxu0 0
  %365 = vmatpush1.bf16.msra.mxu0 %v324
  %366 = vmatprep.subr.bf16.mxu0 0
  %367 = vmatpush1.bf16.msra.mxu0 %v325
  %368 = vmatprep.subr.bf16.mxu0 0
  %369 = vmatpush1.bf16.msra.mxu0 %v326
  %370 = vmatprep.subr.bf16.mxu0 0
  %371 = vmatpush1.bf16.msra.mxu0 %v327
  %372 = vmatprep.subr.bf16.mxu0 0
  %373 = vmatpush1.bf16.msra.mxu0 %v328
  %374 = vmatprep.subr.bf16.mxu0 0
  %375 = vmatpush1.bf16.msra.mxu0 %v329
  %376 = vmatprep.subr.bf16.mxu0 0
  %377 = vmatpush1.bf16.msra.mxu0 %v330
  %378 = vmatprep.subr.bf16.mxu0 0
  %379 = vmatpush1.bf16.msra.mxu0 %v331
  %380 = vmatprep.mubr.bf16.mxu0 %v189
  %381 = vmatmul.mubr.bf16.gmra.mrb[0].mxu0 %v188
  %v382 = vpop.f32.mrb[0].mxu0
  %v383 = vadd.f32 %v90, %v382
  %v384 = vpop.f32.mrb[0].mxu0
  %v385 = vpop.f32.mrb[0].mxu0
  %v386 = vadd.f32 %v90, %v385
  %v387 = vpop.f32.mrb[0].mxu0
  %388 = vmatprep.mubr.bf16.mxu0 %v191
  %389 = vmatmul.mubr.bf16.gmra.mrb[0].mxu0 %v190
  %v390 = vpop.f32.mrb[0].mxu0
  %v391 = vadd.f32 %v90, %v390
  %v392 = vpop.f32.mrb[0].mxu0
  %v393 = vpop.f32.mrb[0].mxu0
  %v394 = vadd.f32 %v90, %v393
  %v395 = vpop.f32.mrb[0].mxu0
  %396 = vmatprep.mubr.bf16.mxu0 %v193
  %397 = vmatmul.mubr.bf16.gmra.mrb[0].mxu0 %v192
  %v398 = vpop.f32.mrb[0].mxu0
  %v399 = vadd.f32 %v90, %v398
  %v400 = vpop.f32.mrb[0].mxu0
  %v401 = vpop.f32.mrb[0].mxu0
  %v402 = vadd.f32 %v90, %v401
  %v403 = vpop.f32.mrb[0].mxu0
  %404 = vmatprep.mubr.bf16.mxu0 %v195
  %405 = vmatmul.mubr.bf16.gmra.mrb[0].mxu0 %v194
  %v406 = vpop.f32.mrb[0].mxu0
  %v407 = vadd.f32 %v90, %v406
  %v408 = vpop.f32.mrb[0].mxu0
  %v409 = vpop.f32.mrb[0].mxu0
  %v410 = vadd.f32 %v90, %v409
  %v411 = vpop.f32.mrb[0].mxu0
  %412 = vmatprep.mubr.bf16.mxu0 %v197
  %413 = vmatmul.mubr.bf16.gmra.mrb[0].mxu0 %v196
  %v414 = vpop.f32.mrb[0].mxu0
  %v415 = vadd.f32 %v90, %v414
  %v416 = vpop.f32.mrb[0].mxu0
  %v417 = vpop.f32.mrb[0].mxu0
  %v418 = vadd.f32 %v90, %v417
  %v419 = vpop.f32.mrb[0].mxu0
  %420 = vmatprep.mubr.bf16.mxu0 %v199
  %421 = vmatmul.mubr.bf16.gmra.mrb[0].mxu0 %v198
  %v422 = vpop.f32.mrb[0].mxu0
  %v423 = vadd.f32 %v90, %v422
  %v424 = vpop.f32.mrb[0].mxu0
  %v425 = vpop.f32.mrb[0].mxu0
  %v426 = vadd.f32 %v90, %v425
  %v427 = vpop.f32.mrb[0].mxu0
  %428 = vmatprep.mubr.bf16.mxu0 %v201
  %429 = vmatmul.mubr.bf16.gmra.mrb[0].mxu0 %v200
  %v430 = vpop.f32.mrb[0].mxu0
  %v431 = vadd.f32 %v90, %v430
  %v432 = vpop.f32.mrb[0].mxu0
  %v433 = vpop.f32.mrb[0].mxu0
  %v434 = vadd.f32 %v90, %v433
  %v435 = vpop.f32.mrb[0].mxu0
  %436 = vmatprep.mubr.bf16.mxu0 %v203
  %437 = vmatmul.mubr.bf16.gmra.mrb[0].mxu0 %v202
  %v438 = vpop.f32.mrb[0].mxu0
  %v439 = vadd.f32 %v90, %v438
  %v440 = vpop.f32.mrb[0].mxu0
  %v441 = vpop.f32.mrb[0].mxu0
  %v442 = vadd.f32 %v90, %v441
  %v443 = vpop.f32.mrb[0].mxu0
  %444 = vmatprep.mubr.bf16.mxu0 %v205
  %445 = vmatmul.mubr.bf16.gmra.mrb[0].mxu0 %v204
  %v446 = vpop.f32.mrb[0].mxu0
  %v447 = vadd.f32 %v90, %v446
  %v448 = vpop.f32.mrb[0].mxu0
  %v449 = vpop.f32.mrb[0].mxu0
  %v450 = vadd.f32 %v90, %v449
  %v451 = vpop.f32.mrb[0].mxu0
  %452 = vmatprep.mubr.bf16.mxu0 %v207
  %453 = vmatmul.mubr.bf16.gmra.mrb[0].mxu0 %v206
  %v454 = vpop.f32.mrb[0].mxu0
  %v455 = vadd.f32 %v90, %v454
  %v456 = vpop.f32.mrb[0].mxu0
  %v457 = vpop.f32.mrb[0].mxu0
  %v458 = vadd.f32 %v90, %v457
  %v459 = vpop.f32.mrb[0].mxu0
  %460 = vmatprep.mubr.bf16.mxu0 %v209
  %461 = vmatmul.mubr.bf16.gmra.mrb[0].mxu0 %v208
  %v462 = vpop.f32.mrb[0].mxu0
  %v463 = vadd.f32 %v90, %v462
  %v464 = vpop.f32.mrb[0].mxu0
  %v465 = vpop.f32.mrb[0].mxu0
  %v466 = vadd.f32 %v90, %v465
  %v467 = vpop.f32.mrb[0].mxu0
  %468 = vmatprep.mubr.bf16.mxu0 %v211
  %469 = vmatmul.mubr.bf16.gmra.mrb[0].mxu0 %v210
  %v470 = vpop.f32.mrb[0].mxu0
  %v471 = vadd.f32 %v90, %v470
  %v472 = vpop.f32.mrb[0].mxu0
  %v473 = vpop.f32.mrb[0].mxu0
  %v474 = vadd.f32 %v90, %v473
  %v475 = vpop.f32.mrb[0].mxu0
  %476 = vmatprep.mubr.bf16.mxu0 %v213
  %477 = vmatmul.mubr.bf16.gmra.mrb[0].mxu0 %v212
  %v478 = vpop.f32.mrb[0].mxu0
  %v479 = vadd.f32 %v90, %v478
  %v480 = vpop.f32.mrb[0].mxu0
  %v481 = vpop.f32.mrb[0].mxu0
  %v482 = vadd.f32 %v90, %v481
  %v483 = vpop.f32.mrb[0].mxu0
  %484 = vmatprep.mubr.bf16.mxu0 %v215
  %485 = vmatmul.mubr.bf16.gmra.mrb[0].mxu0 %v214
  %v486 = vpop.f32.mrb[0].mxu0
  %v487 = vadd.f32 %v90, %v486
  %v488 = vpop.f32.mrb[0].mxu0
  %v489 = vpop.f32.mrb[0].mxu0
  %v490 = vadd.f32 %v90, %v489
  %v491 = vpop.f32.mrb[0].mxu0
  %492 = vmatprep.mubr.bf16.mxu0 %v217
  %493 = vmatmul.mubr.bf16.gmra.mrb[0].mxu0 %v216
  %v494 = vpop.f32.mrb[0].mxu0
  %v495 = vadd.f32 %v90, %v494
  %v496 = vpop.f32.mrb[0].mxu0
  %v497 = vpop.f32.mrb[0].mxu0
  %v498 = vadd.f32 %v90, %v497
  %v499 = vpop.f32.mrb[0].mxu0
  %500 = vmatprep.mubr.bf16.mxu0 %v219
  %501 = vmatmul.mubr.bf16.gmra.mrb[0].mxu0 %v218
  %v502 = vpop.f32.mrb[0].mxu0
  %v503 = vadd.f32 %v90, %v502
  %v504 = vpop.f32.mrb[0].mxu0
  %v505 = vpop.f32.mrb[0].mxu0
  %v506 = vadd.f32 %v90, %v505
  %v507 = vpop.f32.mrb[0].mxu0
  %508 = vdwg.mxu0
  %v509 = vmax.f32 %v383, 0.0
  %v510 = vmax.f32 %v386, 0.0
  %v511 = vmax.f32 %v391, 0.0
  %v512 = vmax.f32 %v394, 0.0
  %v513 = vmax.f32 %v399, 0.0
  %v514 = vmax.f32 %v402, 0.0
  %v515 = vmax.f32 %v407, 0.0
  %v516 = vmax.f32 %v410, 0.0
  %v517 = vmax.f32 %v415, 0.0
  %v518 = vmax.f32 %v418, 0.0
  %v519 = vmax.f32 %v423, 0.0
  %v520 = vmax.f32 %v426, 0.0
  %v521 = vmax.f32 %v431, 0.0
  %v522 = vmax.f32 %v434, 0.0
  %v523 = vmax.f32 %v439, 0.0
  %v524 = vmax.f32 %v442, 0.0
  %v525 = vmax.f32 %v447, 0.0
  %v526 = vmax.f32 %v450, 0.0
  %v527 = vmax.f32 %v455, 0.0
  %v528 = vmax.f32 %v458, 0.0
  %v529 = vmax.f32 %v463, 0.0
  %v530 = vmax.f32 %v466, 0.0
  %v531 = vmax.f32 %v471, 0.0
  %v532 = vmax.f32 %v474, 0.0
  %v533 = vmax.f32 %v479, 0.0
  %v534 = vmax.f32 %v482, 0.0
  %v535 = vmax.f32 %v487, 0.0
  %v536 = vmax.f32 %v490, 0.0
  %v537 = vmax.f32 %v495, 0.0
  %v538 = vmax.f32 %v498, 0.0
  %v539 = vmax.f32 %v503, 0.0
  %v540 = vmax.f32 %v506, 0.0
  %v541 = vpack.c.bf16 %v510, %v509
  %v542 = vpack.c.bf16 %v512, %v511
  %v543 = vpack.c.bf16 %v514, %v513
  %v544 = vpack.c.bf16 %v516, %v515
  %v545 = vpack.c.bf16 %v518, %v517
  %v546 = vpack.c.bf16 %v520, %v519
  %v547 = vpack.c.bf16 %v522, %v521
  %v548 = vpack.c.bf16 %v524, %v523
  %v549 = vpack.c.bf16 %v526, %v525
  %v550 = vpack.c.bf16 %v528, %v527
  %v551 = vpack.c.bf16 %v530, %v529
  %v552 = vpack.c.bf16 %v532, %v531
  %v553 = vpack.c.bf16 %v534, %v533
  %v554 = vpack.c.bf16 %v536, %v535
  %v555 = vpack.c.bf16 %v538, %v537
  %v556 = vpack.c.bf16 %v540, %v539
  %v557 = vld [vmem:[%s3] sm:$0xf]
  %v558 = vld [vmem:[%s3 + $0x4] sm:$0xf]
  %v559 = vld [vmem:[%s3 + $0x8] sm:$0xf]
  %v560 = vld [vmem:[%s3 + $0xc] sm:$0xf]
  %v561 = vld [vmem:[%s3 + $0x10] sm:$0xf]
  %v562 = vld [vmem:[%s3 + $0x14] sm:$0xf]
  %v563 = vld [vmem:[%s3 + $0x18] sm:$0xf]
  %v564 = vld [vmem:[%s3 + $0x1c] sm:$0xf]
  %v565 = vld [vmem:[%s3 + $0x20] sm:$0xf]
  %v566 = vld [vmem:[%s3 + $0x24] sm:$0xf]
  %v567 = vld [vmem:[%s3 + $0x28] sm:$0xf]
  %v568 = vld [vmem:[%s3 + $0x2c] sm:$0xf]
  %v569 = vld [vmem:[%s3 + $0x30] sm:$0xf]
  %v570 = vld [vmem:[%s3 + $0x34] sm:$0xf]
  %v571 = vld [vmem:[%s3 + $0x38] sm:$0xf]
  %v572 = vld [vmem:[%s3 + $0x3c] sm:$0xf]
  %v589 = vunpack.c.l.b16 %v557
  %v590 = vunpack.c.l.b16 %v558
  %v591 = vunpack.c.l.b16 %v559
  %v592 = vunpack.c.l.b16 %v560
  %v593 = vunpack.c.l.b16 %v561
  %v594 = vunpack.c.l.b16 %v562
  %v595 = vunpack.c.l.b16 %v563
  %v596 = vunpack.c.l.b16 %v564
  %v597 = vunpack.c.l.b16 %v565
  %v598 = vunpack.c.l.b16 %v566
  %v599 = vunpack.c.l.b16 %v567
  %v600 = vunpack.c.l.b16 %v568
  %v601 = vunpack.c.l.b16 %v569
  %v602 = vunpack.c.l.b16 %v570
  %v603 = vunpack.c.l.b16 %v571
  %v604 = vunpack.c.l.b16 %v572
  %v605 = vpack.c.b16 %v590, %v589
  %v606 = vpack.c.b16 %v592, %v591
  %v607 = vpack.c.b16 %v594, %v593
  %v608 = vpack.c.b16 %v596, %v595
  %v609 = vpack.c.b16 %v598, %v597
  %v610 = vpack.c.b16 %v600, %v599
  %v611 = vpack.c.b16 %v602, %v601
  %v612 = vpack.c.b16 %v604, %v603
  %621 = vmatprep.subr.bf16.mxu0 0
  %622 = vmatpush1.bf16.msra.mxu0 %v605
  %623 = vmatprep.subr.bf16.mxu0 0
  %624 = vmatpush1.bf16.msra.mxu0 %v606
  %625 = vmatprep.subr.bf16.mxu0 0
  %626 = vmatpush1.bf16.msra.mxu0 %v607
  %627 = vmatprep.subr.bf16.mxu0 0
  %628 = vmatpush1.bf16.msra.mxu0 %v608
  %629 = vmatprep.subr.bf16.mxu0 0
  %630 = vmatpush1.bf16.msra.mxu0 %v609
  %631 = vmatprep.subr.bf16.mxu0 0
  %632 = vmatpush1.bf16.msra.mxu0 %v610
  %633 = vmatprep.subr.bf16.mxu0 0
  %634 = vmatpush1.bf16.msra.mxu0 %v611
  %635 = vmatprep.subr.bf16.mxu0 0
  %636 = vmatpush1.bf16.msra.mxu0 %v612
  %637 = vmatprep.subr.bf16.mxu0 0
  %638 = vmatpush1.bf16.msra.mxu0 0
  %639 = vmatprep.subr.bf16.mxu0 0
  %640 = vmatpush1.bf16.msra.mxu0 0
  %641 = vmatprep.subr.bf16.mxu0 0
  %642 = vmatpush1.bf16.msra.mxu0 0
  %643 = vmatprep.subr.bf16.mxu0 0
  %644 = vmatpush1.bf16.msra.mxu0 0
  %645 = vmatprep.subr.bf16.mxu0 0
  %646 = vmatpush1.bf16.msra.mxu0 0
  %647 = vmatprep.subr.bf16.mxu0 0
  %648 = vmatpush1.bf16.msra.mxu0 0
  %649 = vmatprep.subr.bf16.mxu0 0
  %650 = vmatpush1.bf16.msra.mxu0 0
  %651 = vmatprep.subr.bf16.mxu0 0
  %652 = vmatpush1.bf16.msra.mxu0 0
  %653 = vmatprep.mubr.bf16.mxu0 0
  %654 = vmatmul.mubr.bf16.gmra.mrb[0].mxu0 %v541
  %v655 = vpop.f32.mrb[0].mxu0
  %v656 = vadd.f32 0.0, %v655
  %v657 = vpop.f32.mrb[0].mxu0
  %v658 = vpop.f32.mrb[0].mxu0
  %v659 = vadd.f32 0.0, %v658
  %v660 = vpop.f32.mrb[0].mxu0
  %661 = vmatprep.mubr.bf16.mxu0 0
  %662 = vmatmul.mubr.bf16.gmra.mrb[0].mxu0 %v542
  %v663 = vpop.f32.mrb[0].mxu0
  %v664 = vadd.f32 0.0, %v663
  %v665 = vpop.f32.mrb[0].mxu0
  %v666 = vpop.f32.mrb[0].mxu0
  %v667 = vadd.f32 0.0, %v666
  %v668 = vpop.f32.mrb[0].mxu0
  %669 = vmatprep.mubr.bf16.mxu0 0
  %670 = vmatmul.mubr.bf16.gmra.mrb[0].mxu0 %v543
  %v671 = vpop.f32.mrb[0].mxu0
  %v672 = vadd.f32 0.0, %v671
  %v673 = vpop.f32.mrb[0].mxu0
  %v674 = vpop.f32.mrb[0].mxu0
  %v675 = vadd.f32 0.0, %v674
  %v676 = vpop.f32.mrb[0].mxu0
  %677 = vmatprep.mubr.bf16.mxu0 0
  %678 = vmatmul.mubr.bf16.gmra.mrb[0].mxu0 %v544
  %v679 = vpop.f32.mrb[0].mxu0
  %v680 = vadd.f32 0.0, %v679
  %v681 = vpop.f32.mrb[0].mxu0
  %v682 = vpop.f32.mrb[0].mxu0
  %v683 = vadd.f32 0.0, %v682
  %v684 = vpop.f32.mrb[0].mxu0
  %685 = vmatprep.mubr.bf16.mxu0 0
  %686 = vmatmul.mubr.bf16.gmra.mrb[0].mxu0 %v545
  %v687 = vpop.f32.mrb[0].mxu0
  %v688 = vadd.f32 0.0, %v687
  %v689 = vpop.f32.mrb[0].mxu0
  %v690 = vpop.f32.mrb[0].mxu0
  %v691 = vadd.f32 0.0, %v690
  %v692 = vpop.f32.mrb[0].mxu0
  %693 = vmatprep.mubr.bf16.mxu0 0
  %694 = vmatmul.mubr.bf16.gmra.mrb[0].mxu0 %v546
  %v695 = vpop.f32.mrb[0].mxu0
  %v696 = vadd.f32 0.0, %v695
  %v697 = vpop.f32.mrb[0].mxu0
  %v698 = vpop.f32.mrb[0].mxu0
  %v699 = vadd.f32 0.0, %v698
  %v700 = vpop.f32.mrb[0].mxu0
  %701 = vmatprep.mubr.bf16.mxu0 0
  %702 = vmatmul.mubr.bf16.gmra.mrb[0].mxu0 %v547
  %v703 = vpop.f32.mrb[0].mxu0
  %v704 = vadd.f32 0.0, %v703
  %v705 = vpop.f32.mrb[0].mxu0
  %v706 = vpop.f32.mrb[0].mxu0
  %v707 = vadd.f32 0.0, %v706
  %v708 = vpop.f32.mrb[0].mxu0
  %709 = vmatprep.mubr.bf16.mxu0 0
  %710 = vmatmul.mubr.bf16.gmra.mrb[0].mxu0 %v548
  %v711 = vpop.f32.mrb[0].mxu0
  %v712 = vadd.f32 0.0, %v711
  %v713 = vpop.f32.mrb[0].mxu0
  %v714 = vpop.f32.mrb[0].mxu0
  %v715 = vadd.f32 0.0, %v714
  %v716 = vpop.f32.mrb[0].mxu0
  %717 = vmatprep.mubr.bf16.mxu0 0
  %718 = vmatmul.mubr.bf16.gmra.mrb[0].mxu0 %v549
  %v719 = vpop.f32.mrb[0].mxu0
  %v720 = vadd.f32 0.0, %v719
  %v721 = vpop.f32.mrb[0].mxu0
  %v722 = vpop.f32.mrb[0].mxu0
  %v723 = vadd.f32 0.0, %v722
  %v724 = vpop.f32.mrb[0].mxu0
  %725 = vmatprep.mubr.bf16.mxu0 0
  %726 = vmatmul.mubr.bf16.gmra.mrb[0].mxu0 %v550
  %v727 = vpop.f32.mrb[0].mxu0
  %v728 = vadd.f32 0.0, %v727
  %v729 = vpop.f32.mrb[0].mxu0
  %v730 = vpop.f32.mrb[0].mxu0
  %v731 = vadd.f32 0.0, %v730
  %v732 = vpop.f32.mrb[0].mxu0
  %733 = vmatprep.mubr.bf16.mxu0 0
  %734 = vmatmul.mubr.bf16.gmra.mrb[0].mxu0 %v551
  %v735 = vpop.f32.mrb[0].mxu0
  %v736 = vadd.f32 0.0, %v735
  %v737 = vpop.f32.mrb[0].mxu0
  %v738 = vpop.f32.mrb[0].mxu0
  %v739 = vadd.f32 0.0, %v738
  %v740 = vpop.f32.mrb[0].mxu0
  %741 = vmatprep.mubr.bf16.mxu0 0
  %742 = vmatmul.mubr.bf16.gmra.mrb[0].mxu0 %v552
  %v743 = vpop.f32.mrb[0].mxu0
  %v744 = vadd.f32 0.0, %v743
  %v745 = vpop.f32.mrb[0].mxu0
  %v746 = vpop.f32.mrb[0].mxu0
  %v747 = vadd.f32 0.0, %v746
  %v748 = vpop.f32.mrb[0].mxu0
  %749 = vmatprep.mubr.bf16.mxu0 0
  %750 = vmatmul.mubr.bf16.gmra.mrb[0].mxu0 %v553
  %v751 = vpop.f32.mrb[0].mxu0
  %v752 = vadd.f32 0.0, %v751
  %v753 = vpop.f32.mrb[0].mxu0
  %v754 = vpop.f32.mrb[0].mxu0
  %v755 = vadd.f32 0.0, %v754
  %v756 = vpop.f32.mrb[0].mxu0
  %757 = vmatprep.mubr.bf16.mxu0 0
  %758 = vmatmul.mubr.bf16.gmra.mrb[0].mxu0 %v554
  %v759 = vpop.f32.mrb[0].mxu0
  %v760 = vadd.f32 0.0, %v759
  %v761 = vpop.f32.mrb[0].mxu0
  %v762 = vpop.f32.mrb[0].mxu0
  %v763 = vadd.f32 0.0, %v762
  %v764 = vpop.f32.mrb[0].mxu0
  %765 = vmatprep.mubr.bf16.mxu0 0
  %766 = vmatmul.mubr.bf16.gmra.mrb[0].mxu0 %v555
  %v767 = vpop.f32.mrb[0].mxu0
  %v768 = vadd.f32 0.0, %v767
  %v769 = vpop.f32.mrb[0].mxu0
  %v770 = vpop.f32.mrb[0].mxu0
  %v771 = vadd.f32 0.0, %v770
  %v772 = vpop.f32.mrb[0].mxu0
  %773 = vmatprep.mubr.bf16.mxu0 0
  %774 = vmatmul.mubr.bf16.gmra.mrb[0].mxu0 %v556
  %v775 = vpop.f32.mrb[0].mxu0
  %v776 = vadd.f32 0.0, %v775
  %v777 = vpop.f32.mrb[0].mxu0
  %v778 = vpop.f32.mrb[0].mxu0
  %v779 = vadd.f32 0.0, %v778
  %v780 = vpop.f32.mrb[0].mxu0
  %781 = vdwg.mxu0
  %v782 = vpack.c.bf16 %v659, %v656
  %v783 = vpack.c.bf16 %v667, %v664
  %v784 = vpack.c.bf16 %v675, %v672
  %v785 = vpack.c.bf16 %v683, %v680
  %v786 = vpack.c.bf16 %v691, %v688
  %v787 = vpack.c.bf16 %v699, %v696
  %v788 = vpack.c.bf16 %v707, %v704
  %v789 = vpack.c.bf16 %v715, %v712
  %v790 = vpack.c.bf16 %v723, %v720
  %v791 = vpack.c.bf16 %v731, %v728
  %v792 = vpack.c.bf16 %v739, %v736
  %v793 = vpack.c.bf16 %v747, %v744
  %v794 = vpack.c.bf16 %v755, %v752
  %v795 = vpack.c.bf16 %v763, %v760
  %v796 = vpack.c.bf16 %v771, %v768
  %v797 = vpack.c.bf16 %v779, %v776
  %v798 = vld [vmem:[%s4] sm:$0x1]
  %v800 = vlaneseq
  %v801 = vshrl.u32 %v800, 7
  %v802 = vsub.s32 0, %v801
  %v803 = vrot.slane %v798, %v802
  %805 = vmatprep.subr.bf16.mxu0 0
  %806 = vmatpush1.bf16.msra.mxu0 %v782
  %807 = vmatprep.subr.bf16.mxu0 0
  %808 = vmatpush1.bf16.msra.mxu0 %v783
  %809 = vmatprep.subr.bf16.mxu0 0
  %810 = vmatpush1.bf16.msra.mxu0 %v784
  %811 = vmatprep.subr.bf16.mxu0 0
  %812 = vmatpush1.bf16.msra.mxu0 %v785
  %813 = vmatprep.subr.bf16.mxu0 0
  %814 = vmatpush1.bf16.msra.mxu0 %v786
  %815 = vmatprep.subr.bf16.mxu0 0
  %816 = vmatpush1.bf16.msra.mxu0 %v787
  %817 = vmatprep.subr.bf16.mxu0 0
  %818 = vmatpush1.bf16.msra.mxu0 %v788
  %819 = vmatprep.subr.bf16.mxu0 0
  %820 = vmatpush1.bf16.msra.mxu0 %v789
  %821 = vmatprep.subr.bf16.mxu0 0
  %822 = vmatpush1.bf16.msra.mxu0 %v790
  %823 = vmatprep.subr.bf16.mxu0 0
  %824 = vmatpush1.bf16.msra.mxu0 %v791
  %825 = vmatprep.subr.bf16.mxu0 0
  %826 = vmatpush1.bf16.msra.mxu0 %v792
  %827 = vmatprep.subr.bf16.mxu0 0
  %828 = vmatpush1.bf16.msra.mxu0 %v793
  %829 = vmatprep.subr.bf16.mxu0 0
  %830 = vmatpush1.bf16.msra.mxu0 %v794
  %831 = vmatprep.subr.bf16.mxu0 0
  %832 = vmatpush1.bf16.msra.mxu0 %v795
  %833 = vmatprep.subr.bf16.mxu0 0
  %834 = vmatpush1.bf16.msra.mxu0 %v796
  %835 = vmatprep.subr.bf16.mxu0 0
  %836 = vmatpush1.bf16.msra.mxu0 %v797
  %837 = vmatprep.mubr.bf16.mxu0 %v189
  %838 = vmatmul.mubr.bf16.gmra.mrb[0].mxu0 %v188
  %v839 = vpop.f32.mrb[0].mxu0
  %v840 = vadd.f32 %v803, %v839
  %v841 = vpop.f32.mrb[0].mxu0
  %v842 = vpop.f32.mrb[0].mxu0
  %v843 = vadd.f32 %v803, %v842
  %v844 = vpop.f32.mrb[0].mxu0
  %845 = vmatprep.mubr.bf16.mxu0 %v191
  %846 = vmatmul.mubr.bf16.gmra.mrb[0].mxu0 %v190
  %v847 = vpop.f32.mrb[0].mxu0
  %v848 = vadd.f32 %v803, %v847
  %v849 = vpop.f32.mrb[0].mxu0
  %v850 = vpop.f32.mrb[0].mxu0
  %v851 = vadd.f32 %v803, %v850
  %v852 = vpop.f32.mrb[0].mxu0
  %853 = vmatprep.mubr.bf16.mxu0 %v193
  %854 = vmatmul.mubr.bf16.gmra.mrb[0].mxu0 %v192
  %v855 = vpop.f32.mrb[0].mxu0
  %v856 = vadd.f32 %v803, %v855
  %v857 = vpop.f32.mrb[0].mxu0
  %v858 = vpop.f32.mrb[0].mxu0
  %v859 = vadd.f32 %v803, %v858
  %v860 = vpop.f32.mrb[0].mxu0
  %861 = vmatprep.mubr.bf16.mxu0 %v195
  %862 = vmatmul.mubr.bf16.gmra.mrb[0].mxu0 %v194
  %v863 = vpop.f32.mrb[0].mxu0
  %v864 = vadd.f32 %v803, %v863
  %v865 = vpop.f32.mrb[0].mxu0
  %v866 = vpop.f32.mrb[0].mxu0
  %v867 = vadd.f32 %v803, %v866
  %v868 = vpop.f32.mrb[0].mxu0
  %869 = vmatprep.mubr.bf16.mxu0 %v197
  %870 = vmatmul.mubr.bf16.gmra.mrb[0].mxu0 %v196
  %v871 = vpop.f32.mrb[0].mxu0
  %v872 = vadd.f32 %v803, %v871
  %v873 = vpop.f32.mrb[0].mxu0
  %v874 = vpop.f32.mrb[0].mxu0
  %v875 = vadd.f32 %v803, %v874
  %v876 = vpop.f32.mrb[0].mxu0
  %877 = vmatprep.mubr.bf16.mxu0 %v199
  %878 = vmatmul.mubr.bf16.gmra.mrb[0].mxu0 %v198
  %v879 = vpop.f32.mrb[0].mxu0
  %v880 = vadd.f32 %v803, %v879
  %v881 = vpop.f32.mrb[0].mxu0
  %v882 = vpop.f32.mrb[0].mxu0
  %v883 = vadd.f32 %v803, %v882
  %v884 = vpop.f32.mrb[0].mxu0
  %885 = vmatprep.mubr.bf16.mxu0 %v201
  %886 = vmatmul.mubr.bf16.gmra.mrb[0].mxu0 %v200
  %v887 = vpop.f32.mrb[0].mxu0
  %v888 = vadd.f32 %v803, %v887
  %v889 = vpop.f32.mrb[0].mxu0
  %v890 = vpop.f32.mrb[0].mxu0
  %v891 = vadd.f32 %v803, %v890
  %v892 = vpop.f32.mrb[0].mxu0
  %893 = vmatprep.mubr.bf16.mxu0 %v203
  %894 = vmatmul.mubr.bf16.gmra.mrb[0].mxu0 %v202
  %v895 = vpop.f32.mrb[0].mxu0
  %v896 = vadd.f32 %v803, %v895
  %v897 = vpop.f32.mrb[0].mxu0
  %v898 = vpop.f32.mrb[0].mxu0
  %v899 = vadd.f32 %v803, %v898
  %v900 = vpop.f32.mrb[0].mxu0
  %901 = vmatprep.mubr.bf16.mxu0 %v205
  %902 = vmatmul.mubr.bf16.gmra.mrb[0].mxu0 %v204
  %v903 = vpop.f32.mrb[0].mxu0
  %v904 = vadd.f32 %v803, %v903
  %v905 = vpop.f32.mrb[0].mxu0
  %v906 = vpop.f32.mrb[0].mxu0
  %v907 = vadd.f32 %v803, %v906
  %v908 = vpop.f32.mrb[0].mxu0
  %909 = vmatprep.mubr.bf16.mxu0 %v207
  %910 = vmatmul.mubr.bf16.gmra.mrb[0].mxu0 %v206
  %v911 = vpop.f32.mrb[0].mxu0
  %v912 = vadd.f32 %v803, %v911
  %v913 = vpop.f32.mrb[0].mxu0
  %v914 = vpop.f32.mrb[0].mxu0
  %v915 = vadd.f32 %v803, %v914
  %v916 = vpop.f32.mrb[0].mxu0
  %917 = vmatprep.mubr.bf16.mxu0 %v209
  %918 = vmatmul.mubr.bf16.gmra.mrb[0].mxu0 %v208
  %v919 = vpop.f32.mrb[0].mxu0
  %v920 = vadd.f32 %v803, %v919
  %v921 = vpop.f32.mrb[0].mxu0
  %v922 = vpop.f32.mrb[0].mxu0
  %v923 = vadd.f32 %v803, %v922
  %v924 = vpop.f32.mrb[0].mxu0
  %925 = vmatprep.mubr.bf16.mxu0 %v211
  %926 = vmatmul.mubr.bf16.gmra.mrb[0].mxu0 %v210
  %v927 = vpop.f32.mrb[0].mxu0
  %v928 = vadd.f32 %v803, %v927
  %v929 = vpop.f32.mrb[0].mxu0
  %v930 = vpop.f32.mrb[0].mxu0
  %v931 = vadd.f32 %v803, %v930
  %v932 = vpop.f32.mrb[0].mxu0
  %933 = vmatprep.mubr.bf16.mxu0 %v213
  %934 = vmatmul.mubr.bf16.gmra.mrb[0].mxu0 %v212
  %v935 = vpop.f32.mrb[0].mxu0
  %v936 = vadd.f32 %v803, %v935
  %v937 = vpop.f32.mrb[0].mxu0
  %v938 = vpop.f32.mrb[0].mxu0
  %v939 = vadd.f32 %v803, %v938
  %v940 = vpop.f32.mrb[0].mxu0
  %941 = vmatprep.mubr.bf16.mxu0 %v215
  %942 = vmatmul.mubr.bf16.gmra.mrb[0].mxu0 %v214
  %v943 = vpop.f32.mrb[0].mxu0
  %v944 = vadd.f32 %v803, %v943
  %v945 = vpop.f32.mrb[0].mxu0
  %v946 = vpop.f32.mrb[0].mxu0
  %v947 = vadd.f32 %v803, %v946
  %v948 = vpop.f32.mrb[0].mxu0
  %949 = vmatprep.mubr.bf16.mxu0 %v217
  %950 = vmatmul.mubr.bf16.gmra.mrb[0].mxu0 %v216
  %v951 = vpop.f32.mrb[0].mxu0
  %v952 = vadd.f32 %v803, %v951
  %v953 = vpop.f32.mrb[0].mxu0
  %v954 = vpop.f32.mrb[0].mxu0
  %v955 = vadd.f32 %v803, %v954
  %v956 = vpop.f32.mrb[0].mxu0
  %957 = vmatprep.mubr.bf16.mxu0 %v219
  %958 = vmatmul.mubr.bf16.gmra.mrb[0].mxu0 %v218
  %v959 = vpop.f32.mrb[0].mxu0
  %v960 = vadd.f32 %v803, %v959
  %v961 = vpop.f32.mrb[0].mxu0
  %v962 = vpop.f32.mrb[0].mxu0
  %v963 = vadd.f32 %v803, %v962
  %v964 = vpop.f32.mrb[0].mxu0
  %965 = vdwg.mxu0
  %v966 = vpack.c.bf16 %v843, %v840
  %v967 = vpack.c.bf16 %v851, %v848
  %v968 = vpack.c.bf16 %v859, %v856
  %v969 = vpack.c.bf16 %v867, %v864
  %v970 = vpack.c.bf16 %v875, %v872
  %v971 = vpack.c.bf16 %v883, %v880
  %v972 = vpack.c.bf16 %v891, %v888
  %v973 = vpack.c.bf16 %v899, %v896
  %v974 = vpack.c.bf16 %v907, %v904
  %v975 = vpack.c.bf16 %v915, %v912
  %v976 = vpack.c.bf16 %v923, %v920
  %v977 = vpack.c.bf16 %v931, %v928
  %v978 = vpack.c.bf16 %v939, %v936
  %v979 = vpack.c.bf16 %v947, %v944
  %v980 = vpack.c.bf16 %v955, %v952
  %v981 = vpack.c.bf16 %v963, %v960
  %v998 = vunpack.c.l.b16 %v966
  %v999 = vunpack.c.h.b16 %v966
  %v1000 = vunpack.c.l.b16 %v967
  %v1001 = vunpack.c.h.b16 %v967
  %v1002 = vunpack.c.l.b16 %v968
  %v1003 = vunpack.c.h.b16 %v968
  %v1004 = vunpack.c.l.b16 %v969
  %v1005 = vunpack.c.h.b16 %v969
  %v1006 = vunpack.c.l.b16 %v970
  %v1007 = vunpack.c.h.b16 %v970
  %v1008 = vunpack.c.l.b16 %v971
  %v1009 = vunpack.c.h.b16 %v971
  %v1010 = vunpack.c.l.b16 %v972
  %v1011 = vunpack.c.h.b16 %v972
  %v1012 = vunpack.c.l.b16 %v973
  %v1013 = vunpack.c.h.b16 %v973
  %v1014 = vunpack.c.l.b16 %v974
  %v1015 = vunpack.c.h.b16 %v974
  %v1016 = vunpack.c.l.b16 %v975
  %v1017 = vunpack.c.h.b16 %v975
  %v1018 = vunpack.c.l.b16 %v976
  %v1019 = vunpack.c.h.b16 %v976
  %v1020 = vunpack.c.l.b16 %v977
  %v1021 = vunpack.c.h.b16 %v977
  %v1022 = vunpack.c.l.b16 %v978
  %v1023 = vunpack.c.h.b16 %v978
  %v1024 = vunpack.c.l.b16 %v979
  %v1025 = vunpack.c.h.b16 %v979
  %v1026 = vunpack.c.l.b16 %v980
  %v1027 = vunpack.c.h.b16 %v980
  %v1028 = vunpack.c.l.b16 %v981
  %v1029 = vunpack.c.h.b16 %v981
  %v1030 = vpack.c.b16 %v998, %v998
  %v1031 = vpack.c.b16 %v999, %v999
  %v1032 = vpack.c.b16 %v1000, %v1000
  %v1033 = vpack.c.b16 %v1001, %v1001
  %v1034 = vpack.c.b16 %v1002, %v1002
  %v1035 = vpack.c.b16 %v1003, %v1003
  %v1036 = vpack.c.b16 %v1004, %v1004
  %v1037 = vpack.c.b16 %v1005, %v1005
  %v1038 = vpack.c.b16 %v1006, %v1006
  %v1039 = vpack.c.b16 %v1007, %v1007
  %v1040 = vpack.c.b16 %v1008, %v1008
  %v1041 = vpack.c.b16 %v1009, %v1009
  %v1042 = vpack.c.b16 %v1010, %v1010
  %v1043 = vpack.c.b16 %v1011, %v1011
  %v1044 = vpack.c.b16 %v1012, %v1012
  %v1045 = vpack.c.b16 %v1013, %v1013
  %v1046 = vpack.c.b16 %v1014, %v1014
  %v1047 = vpack.c.b16 %v1015, %v1015
  %v1048 = vpack.c.b16 %v1016, %v1016
  %v1049 = vpack.c.b16 %v1017, %v1017
  %v1050 = vpack.c.b16 %v1018, %v1018
  %v1051 = vpack.c.b16 %v1019, %v1019
  %v1052 = vpack.c.b16 %v1020, %v1020
  %v1053 = vpack.c.b16 %v1021, %v1021
  %v1054 = vpack.c.b16 %v1022, %v1022
  %v1055 = vpack.c.b16 %v1023, %v1023
  %v1056 = vpack.c.b16 %v1024, %v1024
  %v1057 = vpack.c.b16 %v1025, %v1025
  %v1058 = vpack.c.b16 %v1026, %v1026
  %v1059 = vpack.c.b16 %v1027, %v1027
  %v1060 = vpack.c.b16 %v1028, %v1028
  %v1061 = vpack.c.b16 %v1029, %v1029
  %1094 = vst [vmem:[%s5] sm:$0xf] %v1030
  %1095 = vst [vmem:[%s5 + $0x4] sm:$0xf] %v1031
  %1096 = vst [vmem:[%s5 + $0x8] sm:$0xf] %v1032
  %1097 = vst [vmem:[%s5 + $0xc] sm:$0xf] %v1033
  %1098 = vst [vmem:[%s5 + $0x10] sm:$0xf] %v1034
  %1099 = vst [vmem:[%s5 + $0x14] sm:$0xf] %v1035
  %1100 = vst [vmem:[%s5 + $0x18] sm:$0xf] %v1036
  %1101 = vst [vmem:[%s5 + $0x1c] sm:$0xf] %v1037
  %1102 = vst [vmem:[%s5 + $0x20] sm:$0xf] %v1038
  %1103 = vst [vmem:[%s5 + $0x24] sm:$0xf] %v1039
  %1104 = vst [vmem:[%s5 + $0x28] sm:$0xf] %v1040
  %1105 = vst [vmem:[%s5 + $0x2c] sm:$0xf] %v1041
  %1106 = vst [vmem:[%s5 + $0x30] sm:$0xf] %v1042
  %1107 = vst [vmem:[%s5 + $0x34] sm:$0xf] %v1043
  %1108 = vst [vmem:[%s5 + $0x38] sm:$0xf] %v1044
  %1109 = vst [vmem:[%s5 + $0x3c] sm:$0xf] %v1045
  %1110 = vst [vmem:[%s5 + $0x40] sm:$0xf] %v1046
  %1111 = vst [vmem:[%s5 + $0x44] sm:$0xf] %v1047
  %1112 = vst [vmem:[%s5 + $0x48] sm:$0xf] %v1048
  %1113 = vst [vmem:[%s5 + $0x4c] sm:$0xf] %v1049
  %1114 = vst [vmem:[%s5 + $0x50] sm:$0xf] %v1050
  %1115 = vst [vmem:[%s5 + $0x54] sm:$0xf] %v1051
  %1116 = vst [vmem:[%s5 + $0x58] sm:$0xf] %v1052
  %1117 = vst [vmem:[%s5 + $0x5c] sm:$0xf] %v1053
  %1118 = vst [vmem:[%s5 + $0x60] sm:$0xf] %v1054
  %1119 = vst [vmem:[%s5 + $0x64] sm:$0xf] %v1055
  %1120 = vst [vmem:[%s5 + $0x68] sm:$0xf] %v1056
  %1121 = vst [vmem:[%s5 + $0x6c] sm:$0xf] %v1057
  %1122 = vst [vmem:[%s5 + $0x70] sm:$0xf] %v1058
  %1123 = vst [vmem:[%s5 + $0x74] sm:$0xf] %v1059
  %1124 = vst [vmem:[%s5 + $0x78] sm:$0xf] %v1060
  %1125 = vst [vmem:[%s5 + $0x7c] sm:$0xf] %v1061
  // Predicated region
  $region22: #{gae_encoder_forward.1} parent=0 // pred_check
    _
  $region23: #{gae_encoder_forward.1} parent=0 // pred_check_branch
    %1127 = sbr.rel (0) target = $region25
  $region24: #{gae_encoder_forward.1} parent=0 // pred_region
    _
  $region25: #{gae_encoder_forward.1} parent=0 // pred_fallthru
    _
  // Predicated region
  $region26: #{gae_encoder_forward.1} parent=0 // pred_check
    _
  $region27: #{gae_encoder_forward.1} parent=0 // pred_check_branch
    %1129 = sbr.rel (0) target = $region29
  $region28: #{gae_encoder_forward.1} parent=0 // pred_region
    _
  $region29: #{gae_encoder_forward.1} parent=0 // pred_fallthru
    _

</llo_original>
